<compile_context>
chip_gen: v7x
topology: tpu7x:2x2x1
jax: 0.10.0
libtpu: 0.0.40
codegen_flags: <defaults>
</compile_context>

<pallas_src>
import functools

import jax
import jax.numpy as jnp
from jax import lax
from jax.experimental import pallas as pl
from jax.experimental.pallas import tpu as pltpu

HIDDEN = 256


# ----------------------------- in-kernel math ------------------------------
def _mlp_t(x_t, w1, b1, w2, b2):
    """Transposed-layout MLP: returns q_T of shape (out, batch).

    x_t: (K, B)  observations, feature-in-sublane / batch-in-lane.
    w1 : (H, K)  layer-1 weight  (PyTorch (out, in) layout).
    b1 : (H, 1)  layer-1 bias (column).
    w2 : (A, H)  head weight     (PyTorch (out, in) layout).
    b2 : (A, 1)  head bias (column).
    """
    k_dim = x_t.shape[0]
    # K is tiny (4 for CartPole): broadcast FMAs on the VPU; each x_t row read
    # is lane-dense.
    h = w1[:, 0:1] * x_t[0:1, :]
    for k in range(1, k_dim):
        h = h + w1[:, k:k + 1] * x_t[k:k + 1, :]
    h = jnp.maximum(h + b1, 0.0)                       # (H, B)
    # Head on the MXU: (A, H) @ (H, B) -> lane-dense (A, B), no transposes.
    q = lax.dot_general(w2, h, (((1,), (0,)), ((), ())),
                        preferred_element_type=jnp.float32)
    return q + b2


def _greedy_t(q_t):
    """Index of the row-wise max along axis 0 (first index on ties) -> (1, B) i32."""
    n_act = q_t.shape[0]
    if n_act == 2:
        # A == 2 fast path: one compare; ties -> 0, matching argmax.
        return (q_t[1:2, :] > q_t[0:1, :]).astype(jnp.int32)
    idx = lax.broadcasted_iota(jnp.int32, q_t.shape, 0)
    qmax = jnp.max(q_t, axis=0, keepdims=True)
    cand = jnp.where(q_t == qmax, idx, n_act)
    return jnp.min(cand, axis=0, keepdims=True).astype(jnp.int32)


def _select_row(q_t, idx_f32):
    """q_t[idx, b] per column b. idx_f32: (1, B) float-encoded row index."""
    n_act = q_t.shape[0]
    if n_act == 2:
        return jnp.where(idx_f32 >= 0.5, q_t[1:2, :], q_t[0:1, :])
    rows = lax.broadcasted_iota(jnp.float32, q_t.shape, 0)
    return jnp.sum(jnp.where(rows == idx_f32, q_t, 0.0), axis=0, keepdims=True)


# -------------------------------- kernels ----------------------------------
def dqn_kernel(x_ref, w1_ref, b1_ref, w2_ref, b2_ref, q_ref, act_ref):
    q = _mlp_t(x_ref[...], w1_ref[...], b1_ref[...], w2_ref[...], b2_ref[...])
    q_ref[...] = q.astype(q_ref.dtype)         # (A, tb)  lane-dense
    act_ref[...] = _greedy_t(q)                # (1, tb)  lane-dense


def ddqn_kernel(x_ref, w1c_ref, b1c_ref, w2c_ref, b2c_ref, out_ref, *, n_act):
    """Online + target forward through the merged (block-diagonal) network.

    out_ref (packed, lane-dense f32):
      rows [0:A)    q_online, rows [A:2A) q_target,
      row  2A       greedy online action (as f32), remaining rows zero.
    """
    q_all = _mlp_t(x_ref[...], w1c_ref[...], b1c_ref[...],
                   w2c_ref[...], b2c_ref[...])              # (2A, tb)
    act = _greedy_t(q_all[0:n_act, :]).astype(out_ref.dtype)
    out_ref[0:2 * n_act, :] = q_all.astype(out_ref.dtype)
    out_ref[2 * n_act:2 * n_act + 1, :] = act
    pad_rows = out_ref.shape[0] - (2 * n_act + 1)
    if pad_rows > 0:
        out_ref[2 * n_act + 1:, :] = jnp.zeros(
            (pad_rows, out_ref.shape[1]), out_ref.dtype)


def ddqn_td_kernel(x_ref, xn_ref, aux_ref,
                   w1c_ref, b1c_ref, w2c_ref, b2c_ref,
                   out_ref, *, n_act, gamma):
    """Whole DDQL replay-step forward math in one kernel.

    aux_ref rows: 0 = action (float-encoded), 1 = reward, 2 = done (0/1).
    out_ref rows: 0 = q(s, a), 1 = td_target, 2 = td_error,
                  3 = argmax_a q_online(s') (as f32), rows 4..7 zero.
    """
    w1c, b1c, w2c, b2c = w1c_ref[...], b1c_ref[...], w2c_ref[...], b2c_ref[...]
    q_s = _mlp_t(x_ref[...], w1c, b1c, w2c, b2c)    # (2A, tb): [online(s); target(s)]
    q_n = _mlp_t(xn_ref[...], w1c, b1c, w2c, b2c)   # (2A, tb): [online(s'); target(s')]

    q_on_s = q_s[0:n_act, :]
    q_on_n = q_n[0:n_act, :]
    q_tg_n = q_n[n_act:2 * n_act, :]

    act = aux_ref[0:1, :]
    rew = aux_ref[1:2, :]
    done = aux_ref[2:3, :]

    q_sa = _select_row(q_on_s, act)                         # Q_online(s)[a]
    a_star = _greedy_t(q_on_n).astype(jnp.float32)          # argmax_a Q_online(s')
    q_next = _select_row(q_tg_n, a_star)                    # Q_target(s')[a*]
    td_target = rew + gamma * q_next * (1.0 - done)
    td_err = q_sa - td_target

    out_ref[0:1, :] = q_sa.astype(out_ref.dtype)
    out_ref[1:2, :] = td_target.astype(out_ref.dtype)
    out_ref[2:3, :] = td_err.astype(out_ref.dtype)
    out_ref[3:4, :] = a_star.astype(out_ref.dtype)
    out_ref[4:, :] = jnp.zeros((out_ref.shape[0] - 4, out_ref.shape[1]),
                               out_ref.dtype)


# -------------------------------- wrappers ---------------------------------
def _resident(shape):
    # Whole array as one block, same block index every grid step -> stays in
    # VMEM across batch tiles (no re-DMA).
    return pl.BlockSpec(shape, lambda i: (0,) * len(shape))


def _num_tensorcores():
    try:
        kind = jax.devices()[0].device_kind.lower()
    except Exception:
        return 1
    return 2 if "v7" in kind else 1


def _pick_tb(batch, block_b=None):
    """Batch tile: grid=1 on v5e/v6e; two lane-aligned parallel steps on v7x."""
    if block_b is not None:
        return min(block_b, batch)
    n_tc = _num_tensorcores()
    if n_tc <= 1 or batch < 256:
        return batch
    tb = -(-batch // n_tc)          # cdiv
    tb = -(-tb // 128) * 128        # keep the lane dim (.,128)-legal
    return min(tb, batch)


def dqn_forward(x_t, params, *, block_b=None):
    """Single-network forward, transposed layout.

    x_t: (obs, B) f32 (feature-major).  params: PyTorch-layout (w1, b1, w2, b2).
    Returns (q_T: (A, B) f32, greedy_action: (1, B) i32), both lane-dense.
    """
    w1, b1, w2, b2 = params
    K, B = x_t.shape
    H = w1.shape[0]
    A = w2.shape[0]
    tb = _pick_tb(B, block_b)
    cost = pl.CostEstimate(
        flops=int(2 * B * H * (K + A)),
        transcendentals=0,
        bytes_accessed=int(4 * (K * B + H * K + H + A * H + A + A * B + B)))
    return pl.pallas_call(
        dqn_kernel,
        out_shape=(jax.ShapeDtypeStruct((A, B), jnp.float32),
                   jax.ShapeDtypeStruct((1, B), jnp.int32)),
        grid=(pl.cdiv(B, tb),),
        in_specs=[
            pl.BlockSpec((K, tb), lambda i: (0, i)),
            _resident(w1.shape), _resident(b1.shape),
            _resident(w2.shape), _resident(b2.shape),
        ],
        out_specs=(pl.BlockSpec((A, tb), lambda i: (0, i)),
                   pl.BlockSpec((1, tb), lambda i: (0, i))),
        compiler_params=pltpu.CompilerParams(
            dimension_semantics=("parallel",)),
        cost_estimate=cost,
    )(x_t, w1, b1, w2, b2)


def pack_ddqn_weights(online_params, target_params):
    """Merge online + target nets into one set (done once per target sync).

    Returns (w1c (2H,K), b1c (2H,1), w2c block-diag (2A,2H), b2c (2A,1)).
    """
    w1o, b1o, w2o, b2o = online_params
    w1t, b1t, w2t, b2t = target_params
    H = w1o.shape[0]
    A = w2o.shape[0]
    w1c = jnp.concatenate([w1o, w1t], axis=0)
    b1c = jnp.concatenate([b1o, b1t], axis=0)
    w2c = jnp.zeros((2 * A, 2 * H), jnp.float32)
    w2c = w2c.at[:A, :H].set(w2o).at[A:, H:].set(w2t)
    b2c = jnp.concatenate([b2o, b2t], axis=0)
    return w1c, b1c, w2c, b2c


def ddqn_forward(x_t, packed_weights, *, n_act=2, block_b=None):
    """Fused online+target forward; one packed lane-dense output slab.

    Returns f32 array of shape (out_rows, B) with rows
    [0:A) = q_online, [A:2A) = q_target, 2A = greedy online action, rest 0.
    """
    w1c, b1c, w2c, b2c = packed_weights
    K, B = x_t.shape
    H2 = w1c.shape[0]
    A2 = w2c.shape[0]
    out_rows = max(8, -(-(2 * n_act + 1) // 8) * 8)
    tb = _pick_tb(B, block_b)
    cost = pl.CostEstimate(
        flops=int(2 * B * H2 * (K + A2)),
        transcendentals=0,
        bytes_accessed=int(4 * (K * B + H2 * K + H2 + A2 * H2 + A2
                                + out_rows * B)))
    kern = functools.partial(ddqn_kernel, n_act=n_act)
    return pl.pallas_call(
        kern,
        out_shape=jax.ShapeDtypeStruct((out_rows, B), jnp.float32),
        grid=(pl.cdiv(B, tb),),
        in_specs=[pl.BlockSpec((K, tb), lambda i: (0, i)),
                  _resident(w1c.shape), _resident(b1c.shape),
                  _resident(w2c.shape), _resident(b2c.shape)],
        out_specs=pl.BlockSpec((out_rows, tb), lambda i: (0, i)),
        compiler_params=pltpu.CompilerParams(
            dimension_semantics=("parallel",)),
        cost_estimate=cost,
    )(x_t, w1c, b1c, w2c, b2c)


def ddqn_td_targets(x_t, xn_t, actions, rewards, dones, packed_weights, *,
                    gamma=0.99, n_act=2, block_b=None):
    """Whole DDQL replay-step forward math in ONE pallas_call.

    x_t, xn_t: (obs, B) states / next states; actions/rewards/dones: (B,).
    Returns (8, B) f32: rows [q_sa, td_target, td_error, argmax_a q_on(s'), 0...].
    """
    w1c, b1c, w2c, b2c = packed_weights
    K, B = x_t.shape
    H2 = w1c.shape[0]
    A2 = w2c.shape[0]
    aux = jnp.stack([actions.astype(jnp.float32),
                     rewards.astype(jnp.float32),
                     dones.astype(jnp.float32)], axis=0)   # (3, B) lane-dense
    tb = _pick_tb(B, block_b)
    cost = pl.CostEstimate(
        flops=int(4 * B * H2 * (K + A2) + 16 * B),
        transcendentals=0,
        bytes_accessed=int(4 * (2 * K * B + 3 * B + H2 * K + H2 + A2 * H2 + A2
                                + 8 * B)))
    kern = functools.partial(ddqn_td_kernel, n_act=n_act, gamma=float(gamma))
    return pl.pallas_call(
        kern,
        out_shape=jax.ShapeDtypeStruct((8, B), jnp.float32),
        grid=(pl.cdiv(B, tb),),
        in_specs=[pl.BlockSpec((K, tb), lambda i: (0, i)),
                  pl.BlockSpec((K, tb), lambda i: (0, i)),
                  pl.BlockSpec((3, tb), lambda i: (0, i)),
                  _resident(w1c.shape), _resident(b1c.shape),
                  _resident(w2c.shape), _resident(b2c.shape)],
        out_specs=pl.BlockSpec((8, tb), lambda i: (0, i)),
        compiler_params=pltpu.CompilerParams(
            dimension_semantics=("parallel",)),
        cost_estimate=cost,
    )(x_t, xn_t, aux, w1c, b1c, w2c, b2c)


# ------------------------------ params / ref --------------------------------
def init_params(key, observation_space, action_space):
    """PyTorch nn.Linear layout: weight (out, in), bias stored as a column."""
    k1, k2, k3, k4 = jax.random.split(key, 4)
    bound1 = 1.0 / jnp.sqrt(float(observation_space))
    bound2 = 1.0 / jnp.sqrt(float(HIDDEN))
    w1 = jax.random.uniform(k1, (HIDDEN, observation_space), jnp.float32,
                            -bound1, bound1)
    b1 = jax.random.uniform(k2, (HIDDEN, 1), jnp.float32, -bound1, bound1)
    w2 = jax.random.uniform(k3, (action_space, HIDDEN), jnp.float32,
                            -bound2, bound2)
    b2 = jax.random.uniform(k4, (action_space, 1), jnp.float32, -bound2, bound2)
    return w1, b1, w2, b2


def reference(x, params):
    """Pure-JAX DQN forward: x (B, obs) -> (B, A)."""
    w1, b1, w2, b2 = params
    h = jnp.maximum(x @ w1.T + b1[:, 0], 0.0)
    return h @ w2.T + b2[:, 0]


def reference_td(s, sn, a, r, d, online, target, gamma):
    q_on_s = reference(s, online)
    q_on_n = reference(sn, online)
    q_tg_n = reference(sn, target)
    q_sa = jnp.take_along_axis(q_on_s, a[:, None], axis=1)[:, 0]
    a_star = jnp.argmax(q_on_n, axis=1)
    q_next = jnp.take_along_axis(q_tg_n, a_star[:, None], axis=1)[:, 0]
    tdt = r + gamma * q_next * (1.0 - d)
    return q_sa, tdt, q_sa - tdt, a_star


if __name__ == "__main__":
    observation_space = 4   # CartPole-v1 observation dim
    action_space = 2        # CartPole-v1 action dim
    gamma = 0.99

    key = jax.random.PRNGKey(0)
    kx, kb, kn, ka, kr, kd, ko, kt = jax.random.split(key, 8)
    online = init_params(ko, observation_space, action_space)
    target = init_params(kt, observation_space, action_space)
    packed = pack_ddqn_weights(online, target)

    # 1) Acting path: tiny batch, single grid step, lane-dense (A,B)/(1,B) outputs.
    x_small = jax.random.normal(kx, (8, observation_space), jnp.float32)
    q_t, act = jax.block_until_ready(dqn_forward(x_small.T, online))
    ref_q = reference(x_small, online)
    assert q_t.shape == (action_space, 8) and act.shape == (1, 8)
    assert jnp.allclose(q_t.T, ref_q, atol=1e-5, rtol=1e-5)
    assert jnp.array_equal(act[0], jnp.argmax(ref_q, axis=-1).astype(jnp.int32))

    # 2) Replay minibatch: online + target fused via merged weights, ONE packed
    #    lane-dense output slab, per-generation batch tiling.
    B = 1024
    x_big = jax.random.normal(kb, (B, observation_space), jnp.float32)
    slab = jax.block_until_ready(
        ddqn_forward(x_big.T, packed, n_act=action_space))
    ref_on = reference(x_big, online)
    ref_tg = reference(x_big, target)
    assert slab.shape == (8, B)
    assert jnp.allclose(slab[0:action_space].T, ref_on, atol=1e-5, rtol=1e-5)
    assert jnp.allclose(slab[action_space:2 * action_space].T, ref_tg,
                        atol=1e-5, rtol=1e-5)
    assert jnp.array_equal(slab[2 * action_space].astype(jnp.int32),
                           jnp.argmax(ref_on, axis=-1).astype(jnp.int32))

    # 3) Fully fused DDQL replay-step targets (q_sa, td_target, td_error, a*)
    #    in a single pallas_call.
    xn_big = jax.random.normal(kn, (B, observation_space), jnp.float32)
    actions = jax.random.randint(ka, (B,), 0, action_space)
    rewards = jax.random.uniform(kr, (B,), jnp.float32)
    dones = (jax.random.uniform(kd, (B,)) < 0.1).astype(jnp.float32)
    td = jax.block_until_ready(
        ddqn_td_targets(x_big.T, xn_big.T, actions, rewards, dones, packed,
                        gamma=gamma, n_act=action_space))
    q_sa_ref, tdt_ref, tde_ref, a_star_ref = reference_td(
        x_big, xn_big, actions, rewards, dones, online, target, gamma)
    assert td.shape == (8, B)
    assert jnp.allclose(td[0], q_sa_ref, atol=1e-5, rtol=1e-5)
    assert jnp.allclose(td[1], tdt_ref, atol=1e-5, rtol=1e-5)
    assert jnp.allclose(td[2], tde_ref, atol=1e-4, rtol=1e-4)
    assert jnp.array_equal(td[3].astype(jnp.int32),
                           a_star_ref.astype(jnp.int32))

    print("KERNEL_OK")
</pallas_src>

<mosaic_0001>
module attributes {stable_mosaic.version = 11 : i64} {
  func.func @dqn_kernel(%arg0: i32, %arg1: memref<4x8xf32, #tpu.memory_space<vmem>>, %arg2: memref<256x4xf32, #tpu.memory_space<vmem>>, %arg3: memref<256x1xf32, #tpu.memory_space<vmem>>, %arg4: memref<2x256xf32, #tpu.memory_space<vmem>>, %arg5: memref<2x1xf32, #tpu.memory_space<vmem>>, %arg6: memref<2x8xf32, #tpu.memory_space<vmem>>, %arg7: memref<1x8xi32, #tpu.memory_space<vmem>>) attributes {dimension_semantics = [#tpu.dimension_semantics<parallel>], iteration_bounds = array<i64: 1>, scalar_prefetch = 0 : i64, scratch_operands = 0 : i64, tpu.core_type = #tpu.core_type<tc>, window_params = [{transform_indices = @transform_0, window_bounds = array<i64: 4, 8>}, {pipeline_mode = #tpu.pipeline_mode<synchronous>, transform_indices = @transform_1, window_bounds = array<i64: 256, 4>}, {pipeline_mode = #tpu.pipeline_mode<synchronous>, transform_indices = @transform_2, window_bounds = array<i64: 256, 1>}, {pipeline_mode = #tpu.pipeline_mode<synchronous>, transform_indices = @transform_3, window_bounds = array<i64: 2, 256>}, {pipeline_mode = #tpu.pipeline_mode<synchronous>, transform_indices = @transform_4, window_bounds = array<i64: 2, 1>}, {transform_indices = @transform_5, window_bounds = array<i64: 2, 8>}, {transform_indices = @transform_6, window_bounds = array<i64: 1, 8>}]} {
    %c0 = arith.constant 0 : index
    %c0_0 = arith.constant 0 : index
    %0 = vector.load %arg1[%c0, %c0_0] : memref<4x8xf32, #tpu.memory_space<vmem>>, vector<4x8xf32>
    %c0_1 = arith.constant 0 : index
    %c0_2 = arith.constant 0 : index
    %1 = vector.load %arg2[%c0_1, %c0_2] : memref<256x4xf32, #tpu.memory_space<vmem>>, vector<256x4xf32>
    %c0_3 = arith.constant 0 : index
    %c0_4 = arith.constant 0 : index
    %2 = vector.load %arg3[%c0_3, %c0_4] : memref<256x1xf32, #tpu.memory_space<vmem>>, vector<256x1xf32>
    %c0_5 = arith.constant 0 : index
    %c0_6 = arith.constant 0 : index
    %3 = vector.load %arg4[%c0_5, %c0_6] : memref<2x256xf32, #tpu.memory_space<vmem>>, vector<2x256xf32>
    %c0_7 = arith.constant 0 : index
    %c0_8 = arith.constant 0 : index
    %4 = vector.load %arg5[%c0_7, %c0_8] : memref<2x1xf32, #tpu.memory_space<vmem>>, vector<2x1xf32>
    %5 = vector.extract_strided_slice %1 {offsets = [0, 0], sizes = [256, 1], strides = [1, 1]} : vector<256x4xf32> to vector<256x1xf32>
    %6 = vector.extract_strided_slice %0 {offsets = [0, 0], sizes = [1, 8], strides = [1, 1]} : vector<4x8xf32> to vector<1x8xf32>
    %7 = vector.broadcast %5 : vector<256x1xf32> to vector<256x8xf32>
    %8 = vector.broadcast %6 : vector<1x8xf32> to vector<256x8xf32>
    %9 = arith.mulf %7, %8 : vector<256x8xf32>
    %10 = vector.extract_strided_slice %1 {offsets = [0, 1], sizes = [256, 1], strides = [1, 1]} : vector<256x4xf32> to vector<256x1xf32>
    %11 = vector.extract_strided_slice %0 {offsets = [1, 0], sizes = [1, 8], strides = [1, 1]} : vector<4x8xf32> to vector<1x8xf32>
    %12 = vector.broadcast %10 : vector<256x1xf32> to vector<256x8xf32>
    %13 = vector.broadcast %11 : vector<1x8xf32> to vector<256x8xf32>
    %14 = arith.mulf %12, %13 : vector<256x8xf32>
    %15 = arith.addf %9, %14 : vector<256x8xf32>
    %16 = vector.extract_strided_slice %1 {offsets = [0, 2], sizes = [256, 1], strides = [1, 1]} : vector<256x4xf32> to vector<256x1xf32>
    %17 = vector.extract_strided_slice %0 {offsets = [2, 0], sizes = [1, 8], strides = [1, 1]} : vector<4x8xf32> to vector<1x8xf32>
    %18 = vector.broadcast %16 : vector<256x1xf32> to vector<256x8xf32>
    %19 = vector.broadcast %17 : vector<1x8xf32> to vector<256x8xf32>
    %20 = arith.mulf %18, %19 : vector<256x8xf32>
    %21 = arith.addf %15, %20 : vector<256x8xf32>
    %22 = vector.extract_strided_slice %1 {offsets = [0, 3], sizes = [256, 1], strides = [1, 1]} : vector<256x4xf32> to vector<256x1xf32>
    %23 = vector.extract_strided_slice %0 {offsets = [3, 0], sizes = [1, 8], strides = [1, 1]} : vector<4x8xf32> to vector<1x8xf32>
    %24 = vector.broadcast %22 : vector<256x1xf32> to vector<256x8xf32>
    %25 = vector.broadcast %23 : vector<1x8xf32> to vector<256x8xf32>
    %26 = arith.mulf %24, %25 : vector<256x8xf32>
    %27 = arith.addf %21, %26 : vector<256x8xf32>
    %28 = vector.broadcast %2 : vector<256x1xf32> to vector<256x8xf32>
    %29 = arith.addf %27, %28 : vector<256x8xf32>
    %cst = arith.constant 0.000000e+00 : f32
    %30 = vector.broadcast %cst : f32 to vector<256x8xf32>
    %31 = arith.maximumf %29, %30 : vector<256x8xf32>
    %cst_9 = arith.constant dense<0.000000e+00> : vector<2x8xf32>
    %32 = tpu.matmul %3, %31, %cst_9 {dimension_numbers = #tpu.dot_dimension_numbers<[1], [0], [0], [1], [0, 0, 1, 1], [], []>} : vector<2x256xf32>, vector<256x8xf32>, vector<2x8xf32> -> vector<2x8xf32>
    %33 = vector.broadcast %4 : vector<2x1xf32> to vector<2x8xf32>
    %34 = arith.addf %32, %33 : vector<2x8xf32>
    %c0_10 = arith.constant 0 : index
    %c0_11 = arith.constant 0 : index
    %35 = vector.load %arg6[%c0_10, %c0_11] : memref<2x8xf32, #tpu.memory_space<vmem>>, vector<2x8xf32>
    tpu.vector_store %arg6[%c0_10, %c0_11], %34 {strides = array<i32>} : memref<2x8xf32, #tpu.memory_space<vmem>>, vector<2x8xf32>,
    %36 = vector.extract_strided_slice %34 {offsets = [1, 0], sizes = [1, 8], strides = [1, 1]} : vector<2x8xf32> to vector<1x8xf32>
    %37 = vector.extract_strided_slice %34 {offsets = [0, 0], sizes = [1, 8], strides = [1, 1]} : vector<2x8xf32> to vector<1x8xf32>
    %38 = arith.cmpf ogt, %36, %37 : vector<1x8xf32>
    %39 = arith.extui %38 : vector<1x8xi1> to vector<1x8xi32>
    %c0_12 = arith.constant 0 : index
    %c0_13 = arith.constant 0 : index
    %40 = vector.load %arg7[%c0_12, %c0_13] : memref<1x8xi32, #tpu.memory_space<vmem>>, vector<1x8xi32>
    tpu.vector_store %arg7[%c0_12, %c0_13], %39 {strides = array<i32>} : memref<1x8xi32, #tpu.memory_space<vmem>>, vector<1x8xi32>,
    return
  }
  func.func @transform_0(%arg0: i32) -> (i32, i32) {
    %c0_i32 = arith.constant 0 : i32
    %c0_i32_0 = arith.constant 0 : i32
    return %c0_i32, %arg0 : i32, i32
  }
  func.func @transform_1(%arg0: i32) -> (i32, i32) {
    %c0_i32 = arith.constant 0 : i32
    %c0_i32_0 = arith.constant 0 : i32
    %c0_i32_1 = arith.constant 0 : i32
    return %c0_i32, %c0_i32_0 : i32, i32
  }
  func.func @transform_2(%arg0: i32) -> (i32, i32) {
    %c0_i32 = arith.constant 0 : i32
    %c0_i32_0 = arith.constant 0 : i32
    %c0_i32_1 = arith.constant 0 : i32
    return %c0_i32, %c0_i32_0 : i32, i32
  }
  func.func @transform_3(%arg0: i32) -> (i32, i32) {
    %c0_i32 = arith.constant 0 : i32
    %c0_i32_0 = arith.constant 0 : i32
    %c0_i32_1 = arith.constant 0 : i32
    return %c0_i32, %c0_i32_0 : i32, i32
  }
  func.func @transform_4(%arg0: i32) -> (i32, i32) {
    %c0_i32 = arith.constant 0 : i32
    %c0_i32_0 = arith.constant 0 : i32
    %c0_i32_1 = arith.constant 0 : i32
    return %c0_i32, %c0_i32_0 : i32, i32
  }
  func.func @transform_5(%arg0: i32) -> (i32, i32) {
    %c0_i32 = arith.constant 0 : i32
    %c0_i32_0 = arith.constant 0 : i32
    return %c0_i32, %arg0 : i32, i32
  }
  func.func @transform_6(%arg0: i32) -> (i32, i32) {
    %c0_i32 = arith.constant 0 : i32
    %c0_i32_0 = arith.constant 0 : i32
    return %c0_i32, %arg0 : i32, i32
  }
}

</mosaic_0001>

<llo_original>
// kernel: tpu_custom_call.1
$region0: #{tpu_custom_call.1}
  #allocation0 [shape = 'u32[]', space=smem, size = 0x4, offset = 0x4, fixed_abs, tag = 'smem constant byte address 0x4 - core index']
  #allocation1 [shape = 'u32[144,128]{1,0:T(1,128)}', space=vmem, size = 0x12000, scoped, tag = 'internal scratch']
  %s0 = inlined_call_operand.vmem [shape: f32[4,8], index: 0, kind: input, shape index: {}]
  %s1 = inlined_call_operand.vmem [shape: f32[256,4], index: 1, kind: input, shape index: {}]
  %s2 = inlined_call_operand.vmem [shape: f32[256,1], index: 2, kind: input, shape index: {}]
  %s3 = inlined_call_operand.vmem [shape: f32[2,256], index: 3, kind: input, shape index: {}]
  %s4 = inlined_call_operand.vmem [shape: f32[2,1], index: 4, kind: input, shape index: {}]
  %s5 = inlined_call_operand.hbm [shape: f32[2,8], index: 5, kind: output, shape index: {0}]
  %s6 = inlined_call_operand.hbm [shape: s32[1,8], index: 6, kind: output, shape index: {1}]
  %7 = xla_tuple %s5, %s6
  %s8 = sld [smem:[#allocation0]]
  $region38: #{tpu_custom_call.1} parent=0
    _
  %s10 = ssub.s32 1, %s8
  %s11 = scalar_select 0, %s10, %s8
  $region1: #{tpu_custom_call.1} parent=0
    #allocation2 [shape = 'u8[1024]{0}', space=vmem, size = 0x400, scoped, tag = 'output window, operand 0, single buffered']
    #allocation3 [shape = 's32[1]{0}', space=sflag, size = 0x4, scoped, tag = 'scoped memory for tpu_custom_call.1']
    #allocation4 [shape = 'u8[512]{0}', space=vmem, size = 0x400, scoped, tag = 'output window, operand 1, single buffered']
    #allocation5 [shape = 's32[1]{0}', space=sflag, size = 0x4, scoped, tag = 'scoped memory for tpu_custom_call.1']
    %12 = vsyncpa [#allocation3], 0
    %13 = vsyncpa [#allocation5], 0
    // Predicated region
    $region2: #{tpu_custom_call.1} parent=1 // pred_check
      _
    $region3: #{tpu_custom_call.1} parent=1 // pred_check_branch
      %15 = sbr.rel (0) target = $region5
    $region4: #{tpu_custom_call.1} parent=1 // pred_region
      _
    $region5: #{tpu_custom_call.1} parent=1 // pred_fallthru
      _
    // Predicated region
    $region6: #{tpu_custom_call.1} parent=1 // pred_check
      _
    $region7: #{tpu_custom_call.1} parent=1 // pred_check_branch
      %17 = sbr.rel (0) target = $region9
    $region8: #{tpu_custom_call.1} parent=1 // pred_region
      _
    $region9: #{tpu_custom_call.1} parent=1 // pred_fallthru
      _
    // Predicated region
    $region10: #{tpu_custom_call.1} parent=1 // pred_check
      _
    $region11: #{tpu_custom_call.1} parent=1 // pred_check_branch
      %19 = sbr.rel (0) target = $region13
    $region12: #{tpu_custom_call.1} parent=1 // pred_region
      _
    $region13: #{tpu_custom_call.1} parent=1 // pred_fallthru
      _
    // Predicated region
    $region14: #{tpu_custom_call.1} parent=1 // pred_check
      _
    $region15: #{tpu_custom_call.1} parent=1 // pred_check_branch
      %21 = sbr.rel (0) target = $region17
    $region16: #{tpu_custom_call.1} parent=1 // pred_region
      _
    $region17: #{tpu_custom_call.1} parent=1 // pred_fallthru
      _
    // Predicated region
    $region18: #{tpu_custom_call.1} parent=1 // pred_check
      _
    $region19: #{tpu_custom_call.1} parent=1 // pred_check_branch
      %23 = sbr.rel (0) target = $region21
    $region20: #{tpu_custom_call.1} parent=1 // pred_region
      _
    $region21: #{tpu_custom_call.1} parent=1 // pred_fallthru
      _
    %v24 = vld [vmem:[%s0] sm:$0xf]
    %v25 = vld [vmem:[%s1] sm:$0xff]
    %v26 = vld [vmem:[%s1 + $0x8] sm:$0xff]
    %v27 = vld [vmem:[%s1 + $0x10] sm:$0xff]
    %v28 = vld [vmem:[%s1 + $0x18] sm:$0xff]
    %v29 = vld [vmem:[%s1 + $0x20] sm:$0xff]
    %v30 = vld [vmem:[%s1 + $0x28] sm:$0xff]
    %v31 = vld [vmem:[%s1 + $0x30] sm:$0xff]
    %v32 = vld [vmem:[%s1 + $0x38] sm:$0xff]
    %v33 = vld [vmem:[%s1 + $0x40] sm:$0xff]
    %v34 = vld [vmem:[%s1 + $0x48] sm:$0xff]
    %v35 = vld [vmem:[%s1 + $0x50] sm:$0xff]
    %v36 = vld [vmem:[%s1 + $0x58] sm:$0xff]
    %v37 = vld [vmem:[%s1 + $0x60] sm:$0xff]
    %v38 = vld [vmem:[%s1 + $0x68] sm:$0xff]
    %v39 = vld [vmem:[%s1 + $0x70] sm:$0xff]
    %v40 = vld [vmem:[%s1 + $0x78] sm:$0xff]
    %v41 = vld [vmem:[%s1 + $0x80] sm:$0xff]
    %v42 = vld [vmem:[%s1 + $0x88] sm:$0xff]
    %v43 = vld [vmem:[%s1 + $0x90] sm:$0xff]
    %v44 = vld [vmem:[%s1 + $0x98] sm:$0xff]
    %v45 = vld [vmem:[%s1 + $0xa0] sm:$0xff]
    %v46 = vld [vmem:[%s1 + $0xa8] sm:$0xff]
    %v47 = vld [vmem:[%s1 + $0xb0] sm:$0xff]
    %v48 = vld [vmem:[%s1 + $0xb8] sm:$0xff]
    %v49 = vld [vmem:[%s1 + $0xc0] sm:$0xff]
    %v50 = vld [vmem:[%s1 + $0xc8] sm:$0xff]
    %v51 = vld [vmem:[%s1 + $0xd0] sm:$0xff]
    %v52 = vld [vmem:[%s1 + $0xd8] sm:$0xff]
    %v53 = vld [vmem:[%s1 + $0xe0] sm:$0xff]
    %v54 = vld [vmem:[%s1 + $0xe8] sm:$0xff]
    %v55 = vld [vmem:[%s1 + $0xf0] sm:$0xff]
    %v56 = vld [vmem:[%s1 + $0xf8] sm:$0xff]
    %v57 = vld [vmem:[%s2] sm:$0xff]
    %v58 = vld [vmem:[%s2 + $0x8] sm:$0xff]
    %v59 = vld [vmem:[%s2 + $0x10] sm:$0xff]
    %v60 = vld [vmem:[%s2 + $0x18] sm:$0xff]
    %v61 = vld [vmem:[%s2 + $0x20] sm:$0xff]
    %v62 = vld [vmem:[%s2 + $0x28] sm:$0xff]
    %v63 = vld [vmem:[%s2 + $0x30] sm:$0xff]
    %v64 = vld [vmem:[%s2 + $0x38] sm:$0xff]
    %v65 = vld [vmem:[%s2 + $0x40] sm:$0xff]
    %v66 = vld [vmem:[%s2 + $0x48] sm:$0xff]
    %v67 = vld [vmem:[%s2 + $0x50] sm:$0xff]
    %v68 = vld [vmem:[%s2 + $0x58] sm:$0xff]
    %v69 = vld [vmem:[%s2 + $0x60] sm:$0xff]
    %v70 = vld [vmem:[%s2 + $0x68] sm:$0xff]
    %v71 = vld [vmem:[%s2 + $0x70] sm:$0xff]
    %v72 = vld [vmem:[%s2 + $0x78] sm:$0xff]
    %v73 = vld [vmem:[%s2 + $0x80] sm:$0xff]
    %v74 = vld [vmem:[%s2 + $0x88] sm:$0xff]
    %v75 = vld [vmem:[%s2 + $0x90] sm:$0xff]
    %v76 = vld [vmem:[%s2 + $0x98] sm:$0xff]
    %v77 = vld [vmem:[%s2 + $0xa0] sm:$0xff]
    %v78 = vld [vmem:[%s2 + $0xa8] sm:$0xff]
    %v79 = vld [vmem:[%s2 + $0xb0] sm:$0xff]
    %v80 = vld [vmem:[%s2 + $0xb8] sm:$0xff]
    %v81 = vld [vmem:[%s2 + $0xc0] sm:$0xff]
    %v82 = vld [vmem:[%s2 + $0xc8] sm:$0xff]
    %v83 = vld [vmem:[%s2 + $0xd0] sm:$0xff]
    %v84 = vld [vmem:[%s2 + $0xd8] sm:$0xff]
    %v85 = vld [vmem:[%s2 + $0xe0] sm:$0xff]
    %v86 = vld [vmem:[%s2 + $0xe8] sm:$0xff]
    %v87 = vld [vmem:[%s2 + $0xf0] sm:$0xff]
    %v88 = vld [vmem:[%s2 + $0xf8] sm:$0xff]
    %v89 = vld [vmem:[%s3] sm:$0xf]
    %v90 = vld [vmem:[%s4] sm:$0x3]
    %92 = vset.pattern.permute.xlu0 0
    %93 = vperm.xlu0 %92, %v25
    %v94 = vpop.permute.xlu0 %93
    %97 = vset.pattern.permute.xlu0 0
    %98 = vperm.xlu0 %97, %v26
    %v99 = vpop.permute.xlu0 %98
    %102 = vset.pattern.permute.xlu0 0
    %103 = vperm.xlu0 %102, %v27
    %v104 = vpop.permute.xlu0 %103
    %107 = vset.pattern.permute.xlu0 0
    %108 = vperm.xlu0 %107, %v28
    %v109 = vpop.permute.xlu0 %108
    %112 = vset.pattern.permute.xlu0 0
    %113 = vperm.xlu0 %112, %v29
    %v114 = vpop.permute.xlu0 %113
    %117 = vset.pattern.permute.xlu0 0
    %118 = vperm.xlu0 %117, %v30
    %v119 = vpop.permute.xlu0 %118
    %122 = vset.pattern.permute.xlu0 0
    %123 = vperm.xlu0 %122, %v31
    %v124 = vpop.permute.xlu0 %123
    %127 = vset.pattern.permute.xlu0 0
    %128 = vperm.xlu0 %127, %v32
    %v129 = vpop.permute.xlu0 %128
    %132 = vset.pattern.permute.xlu0 0
    %133 = vperm.xlu0 %132, %v33
    %v134 = vpop.permute.xlu0 %133
    %137 = vset.pattern.permute.xlu0 0
    %138 = vperm.xlu0 %137, %v34
    %v139 = vpop.permute.xlu0 %138
    %142 = vset.pattern.permute.xlu0 0
    %143 = vperm.xlu0 %142, %v35
    %v144 = vpop.permute.xlu0 %143
    %147 = vset.pattern.permute.xlu0 0
    %148 = vperm.xlu0 %147, %v36
    %v149 = vpop.permute.xlu0 %148
    %152 = vset.pattern.permute.xlu0 0
    %153 = vperm.xlu0 %152, %v37
    %v154 = vpop.permute.xlu0 %153
    %157 = vset.pattern.permute.xlu0 0
    %158 = vperm.xlu0 %157, %v38
    %v159 = vpop.permute.xlu0 %158
    %162 = vset.pattern.permute.xlu0 0
    %163 = vperm.xlu0 %162, %v39
    %v164 = vpop.permute.xlu0 %163
    %167 = vset.pattern.permute.xlu0 0
    %168 = vperm.xlu0 %167, %v40
    %v169 = vpop.permute.xlu0 %168
    %172 = vset.pattern.permute.xlu0 0
    %173 = vperm.xlu0 %172, %v41
    %v174 = vpop.permute.xlu0 %173
    %177 = vset.pattern.permute.xlu0 0
    %178 = vperm.xlu0 %177, %v42
    %v179 = vpop.permute.xlu0 %178
    %182 = vset.pattern.permute.xlu0 0
    %183 = vperm.xlu0 %182, %v43
    %v184 = vpop.permute.xlu0 %183
    %187 = vset.pattern.permute.xlu0 0
    %188 = vperm.xlu0 %187, %v44
    %v189 = vpop.permute.xlu0 %188
    %192 = vset.pattern.permute.xlu0 0
    %193 = vperm.xlu0 %192, %v45
    %v194 = vpop.permute.xlu0 %193
    %197 = vset.pattern.permute.xlu0 0
    %198 = vperm.xlu0 %197, %v46
    %v199 = vpop.permute.xlu0 %198
    %202 = vset.pattern.permute.xlu0 0
    %203 = vperm.xlu0 %202, %v47
    %v204 = vpop.permute.xlu0 %203
    %207 = vset.pattern.permute.xlu0 0
    %208 = vperm.xlu0 %207, %v48
    %v209 = vpop.permute.xlu0 %208
    %212 = vset.pattern.permute.xlu0 0
    %213 = vperm.xlu0 %212, %v49
    %v214 = vpop.permute.xlu0 %213
    %217 = vset.pattern.permute.xlu0 0
    %218 = vperm.xlu0 %217, %v50
    %v219 = vpop.permute.xlu0 %218
    %222 = vset.pattern.permute.xlu0 0
    %223 = vperm.xlu0 %222, %v51
    %v224 = vpop.permute.xlu0 %223
    %227 = vset.pattern.permute.xlu0 0
    %228 = vperm.xlu0 %227, %v52
    %v229 = vpop.permute.xlu0 %228
    %232 = vset.pattern.permute.xlu0 0
    %233 = vperm.xlu0 %232, %v53
    %v234 = vpop.permute.xlu0 %233
    %237 = vset.pattern.permute.xlu0 0
    %238 = vperm.xlu0 %237, %v54
    %v239 = vpop.permute.xlu0 %238
    %242 = vset.pattern.permute.xlu0 0
    %243 = vperm.xlu0 %242, %v55
    %v244 = vpop.permute.xlu0 %243
    %247 = vset.pattern.permute.xlu0 0
    %248 = vperm.xlu0 %247, %v56
    %v249 = vpop.permute.xlu0 %248
    %v251 = vlaneseq
    %v252 = vshrl.u32 %v251, 7
    %v253 = vsub.s32 0, %v252
    %v254 = vrot.slane %v24, %v253
    %v255 = vmul.f32 %v94, %v254
    %v256 = vmul.f32 %v99, %v254
    %v257 = vmul.f32 %v104, %v254
    %v258 = vmul.f32 %v109, %v254
    %v259 = vmul.f32 %v114, %v254
    %v260 = vmul.f32 %v119, %v254
    %v261 = vmul.f32 %v124, %v254
    %v262 = vmul.f32 %v129, %v254
    %v263 = vmul.f32 %v134, %v254
    %v264 = vmul.f32 %v139, %v254
    %v265 = vmul.f32 %v144, %v254
    %v266 = vmul.f32 %v149, %v254
    %v267 = vmul.f32 %v154, %v254
    %v268 = vmul.f32 %v159, %v254
    %v269 = vmul.f32 %v164, %v254
    %v270 = vmul.f32 %v169, %v254
    %v271 = vmul.f32 %v174, %v254
    %v272 = vmul.f32 %v179, %v254
    %v273 = vmul.f32 %v184, %v254
    %v274 = vmul.f32 %v189, %v254
    %v275 = vmul.f32 %v194, %v254
    %v276 = vmul.f32 %v199, %v254
    %v277 = vmul.f32 %v204, %v254
    %v278 = vmul.f32 %v209, %v254
    %v279 = vmul.f32 %v214, %v254
    %v280 = vmul.f32 %v219, %v254
    %v281 = vmul.f32 %v224, %v254
    %v282 = vmul.f32 %v229, %v254
    %v283 = vmul.f32 %v234, %v254
    %v284 = vmul.f32 %v239, %v254
    %v285 = vmul.f32 %v244, %v254
    %v286 = vmul.f32 %v249, %v254
    %287 = vset.pattern.permute.xlu0 1
    %288 = vperm.xlu0 %287, %v25
    %v289 = vpop.permute.xlu0 %288
    %291 = vset.pattern.permute.xlu0 1
    %292 = vperm.xlu0 %291, %v26
    %v293 = vpop.permute.xlu0 %292
    %295 = vset.pattern.permute.xlu0 1
    %296 = vperm.xlu0 %295, %v27
    %v297 = vpop.permute.xlu0 %296
    %299 = vset.pattern.permute.xlu0 1
    %300 = vperm.xlu0 %299, %v28
    %v301 = vpop.permute.xlu0 %300
    %303 = vset.pattern.permute.xlu0 1
    %304 = vperm.xlu0 %303, %v29
    %v305 = vpop.permute.xlu0 %304
    %307 = vset.pattern.permute.xlu0 1
    %308 = vperm.xlu0 %307, %v30
    %v309 = vpop.permute.xlu0 %308
    %311 = vset.pattern.permute.xlu0 1
    %312 = vperm.xlu0 %311, %v31
    %v313 = vpop.permute.xlu0 %312
    %315 = vset.pattern.permute.xlu0 1
    %316 = vperm.xlu0 %315, %v32
    %v317 = vpop.permute.xlu0 %316
    %319 = vset.pattern.permute.xlu0 1
    %320 = vperm.xlu0 %319, %v33
    %v321 = vpop.permute.xlu0 %320
    %323 = vset.pattern.permute.xlu0 1
    %324 = vperm.xlu0 %323, %v34
    %v325 = vpop.permute.xlu0 %324
    %327 = vset.pattern.permute.xlu0 1
    %328 = vperm.xlu0 %327, %v35
    %v329 = vpop.permute.xlu0 %328
    %331 = vset.pattern.permute.xlu0 1
    %332 = vperm.xlu0 %331, %v36
    %v333 = vpop.permute.xlu0 %332
    %335 = vset.pattern.permute.xlu0 1
    %336 = vperm.xlu0 %335, %v37
    %v337 = vpop.permute.xlu0 %336
    %339 = vset.pattern.permute.xlu0 1
    %340 = vperm.xlu0 %339, %v38
    %v341 = vpop.permute.xlu0 %340
    %343 = vset.pattern.permute.xlu0 1
    %344 = vperm.xlu0 %343, %v39
    %v345 = vpop.permute.xlu0 %344
    %347 = vset.pattern.permute.xlu0 1
    %348 = vperm.xlu0 %347, %v40
    %v349 = vpop.permute.xlu0 %348
    %351 = vset.pattern.permute.xlu0 1
    %352 = vperm.xlu0 %351, %v41
    %v353 = vpop.permute.xlu0 %352
    %355 = vset.pattern.permute.xlu0 1
    %356 = vperm.xlu0 %355, %v42
    %v357 = vpop.permute.xlu0 %356
    %359 = vset.pattern.permute.xlu0 1
    %360 = vperm.xlu0 %359, %v43
    %v361 = vpop.permute.xlu0 %360
    %363 = vset.pattern.permute.xlu0 1
    %364 = vperm.xlu0 %363, %v44
    %v365 = vpop.permute.xlu0 %364
    %367 = vset.pattern.permute.xlu0 1
    %368 = vperm.xlu0 %367, %v45
    %v369 = vpop.permute.xlu0 %368
    %371 = vset.pattern.permute.xlu0 1
    %372 = vperm.xlu0 %371, %v46
    %v373 = vpop.permute.xlu0 %372
    %375 = vset.pattern.permute.xlu0 1
    %376 = vperm.xlu0 %375, %v47
    %v377 = vpop.permute.xlu0 %376
    %379 = vset.pattern.permute.xlu0 1
    %380 = vperm.xlu0 %379, %v48
    %v381 = vpop.permute.xlu0 %380
    %383 = vset.pattern.permute.xlu0 1
    %384 = vperm.xlu0 %383, %v49
    %v385 = vpop.permute.xlu0 %384
    %387 = vset.pattern.permute.xlu0 1
    %388 = vperm.xlu0 %387, %v50
    %v389 = vpop.permute.xlu0 %388
    %391 = vset.pattern.permute.xlu0 1
    %392 = vperm.xlu0 %391, %v51
    %v393 = vpop.permute.xlu0 %392
    %395 = vset.pattern.permute.xlu0 1
    %396 = vperm.xlu0 %395, %v52
    %v397 = vpop.permute.xlu0 %396
    %399 = vset.pattern.permute.xlu0 1
    %400 = vperm.xlu0 %399, %v53
    %v401 = vpop.permute.xlu0 %400
    %403 = vset.pattern.permute.xlu0 1
    %404 = vperm.xlu0 %403, %v54
    %v405 = vpop.permute.xlu0 %404
    %407 = vset.pattern.permute.xlu0 1
    %408 = vperm.xlu0 %407, %v55
    %v409 = vpop.permute.xlu0 %408
    %411 = vset.pattern.permute.xlu0 1
    %412 = vperm.xlu0 %411, %v56
    %v413 = vpop.permute.xlu0 %412
    %v415 = vlaneseq
    %v416 = vshrl.u32 %v415, 7
    %v417 = vsub.s32 1, %v416
    %v418 = vrot.slane %v24, %v417
    %v419 = vmul.f32 %v289, %v418
    %v420 = vmul.f32 %v293, %v418
    %v421 = vmul.f32 %v297, %v418
    %v422 = vmul.f32 %v301, %v418
    %v423 = vmul.f32 %v305, %v418
    %v424 = vmul.f32 %v309, %v418
    %v425 = vmul.f32 %v313, %v418
    %v426 = vmul.f32 %v317, %v418
    %v427 = vmul.f32 %v321, %v418
    %v428 = vmul.f32 %v325, %v418
    %v429 = vmul.f32 %v329, %v418
    %v430 = vmul.f32 %v333, %v418
    %v431 = vmul.f32 %v337, %v418
    %v432 = vmul.f32 %v341, %v418
    %v433 = vmul.f32 %v345, %v418
    %v434 = vmul.f32 %v349, %v418
    %v435 = vmul.f32 %v353, %v418
    %v436 = vmul.f32 %v357, %v418
    %v437 = vmul.f32 %v361, %v418
    %v438 = vmul.f32 %v365, %v418
    %v439 = vmul.f32 %v369, %v418
    %v440 = vmul.f32 %v373, %v418
    %v441 = vmul.f32 %v377, %v418
    %v442 = vmul.f32 %v381, %v418
    %v443 = vmul.f32 %v385, %v418
    %v444 = vmul.f32 %v389, %v418
    %v445 = vmul.f32 %v393, %v418
    %v446 = vmul.f32 %v397, %v418
    %v447 = vmul.f32 %v401, %v418
    %v448 = vmul.f32 %v405, %v418
    %v449 = vmul.f32 %v409, %v418
    %v450 = vmul.f32 %v413, %v418
    %v451 = vadd.f32 %v255, %v419
    %v452 = vadd.f32 %v256, %v420
    %v453 = vadd.f32 %v257, %v421
    %v454 = vadd.f32 %v258, %v422
    %v455 = vadd.f32 %v259, %v423
    %v456 = vadd.f32 %v260, %v424
    %v457 = vadd.f32 %v261, %v425
    %v458 = vadd.f32 %v262, %v426
    %v459 = vadd.f32 %v263, %v427
    %v460 = vadd.f32 %v264, %v428
    %v461 = vadd.f32 %v265, %v429
    %v462 = vadd.f32 %v266, %v430
    %v463 = vadd.f32 %v267, %v431
    %v464 = vadd.f32 %v268, %v432
    %v465 = vadd.f32 %v269, %v433
    %v466 = vadd.f32 %v270, %v434
    %v467 = vadd.f32 %v271, %v435
    %v468 = vadd.f32 %v272, %v436
    %v469 = vadd.f32 %v273, %v437
    %v470 = vadd.f32 %v274, %v438
    %v471 = vadd.f32 %v275, %v439
    %v472 = vadd.f32 %v276, %v440
    %v473 = vadd.f32 %v277, %v441
    %v474 = vadd.f32 %v278, %v442
    %v475 = vadd.f32 %v279, %v443
    %v476 = vadd.f32 %v280, %v444
    %v477 = vadd.f32 %v281, %v445
    %v478 = vadd.f32 %v282, %v446
    %v479 = vadd.f32 %v283, %v447
    %v480 = vadd.f32 %v284, %v448
    %v481 = vadd.f32 %v285, %v449
    %v482 = vadd.f32 %v286, %v450
    %483 = vset.pattern.permute.xlu0 2
    %484 = vperm.xlu0 %483, %v25
    %v485 = vpop.permute.xlu0 %484
    %487 = vset.pattern.permute.xlu0 2
    %488 = vperm.xlu0 %487, %v26
    %v489 = vpop.permute.xlu0 %488
    %491 = vset.pattern.permute.xlu0 2
    %492 = vperm.xlu0 %491, %v27
    %v493 = vpop.permute.xlu0 %492
    %495 = vset.pattern.permute.xlu0 2
    %496 = vperm.xlu0 %495, %v28
    %v497 = vpop.permute.xlu0 %496
    %499 = vset.pattern.permute.xlu0 2
    %500 = vperm.xlu0 %499, %v29
    %v501 = vpop.permute.xlu0 %500
    %503 = vset.pattern.permute.xlu0 2
    %504 = vperm.xlu0 %503, %v30
    %v505 = vpop.permute.xlu0 %504
    %507 = vset.pattern.permute.xlu0 2
    %508 = vperm.xlu0 %507, %v31
    %v509 = vpop.permute.xlu0 %508
    %511 = vset.pattern.permute.xlu0 2
    %512 = vperm.xlu0 %511, %v32
    %v513 = vpop.permute.xlu0 %512
    %515 = vset.pattern.permute.xlu0 2
    %516 = vperm.xlu0 %515, %v33
    %v517 = vpop.permute.xlu0 %516
    %519 = vset.pattern.permute.xlu0 2
    %520 = vperm.xlu0 %519, %v34
    %v521 = vpop.permute.xlu0 %520
    %523 = vset.pattern.permute.xlu0 2
    %524 = vperm.xlu0 %523, %v35
    %v525 = vpop.permute.xlu0 %524
    %527 = vset.pattern.permute.xlu0 2
    %528 = vperm.xlu0 %527, %v36
    %v529 = vpop.permute.xlu0 %528
    %531 = vset.pattern.permute.xlu0 2
    %532 = vperm.xlu0 %531, %v37
    %v533 = vpop.permute.xlu0 %532
    %535 = vset.pattern.permute.xlu0 2
    %536 = vperm.xlu0 %535, %v38
    %v537 = vpop.permute.xlu0 %536
    %539 = vset.pattern.permute.xlu0 2
    %540 = vperm.xlu0 %539, %v39
    %v541 = vpop.permute.xlu0 %540
    %543 = vset.pattern.permute.xlu0 2
    %544 = vperm.xlu0 %543, %v40
    %v545 = vpop.permute.xlu0 %544
    %547 = vset.pattern.permute.xlu0 2
    %548 = vperm.xlu0 %547, %v41
    %v549 = vpop.permute.xlu0 %548
    %551 = vset.pattern.permute.xlu0 2
    %552 = vperm.xlu0 %551, %v42
    %v553 = vpop.permute.xlu0 %552
    %555 = vset.pattern.permute.xlu0 2
    %556 = vperm.xlu0 %555, %v43
    %v557 = vpop.permute.xlu0 %556
    %559 = vset.pattern.permute.xlu0 2
    %560 = vperm.xlu0 %559, %v44
    %v561 = vpop.permute.xlu0 %560
    %563 = vset.pattern.permute.xlu0 2
    %564 = vperm.xlu0 %563, %v45
    %v565 = vpop.permute.xlu0 %564
    %567 = vset.pattern.permute.xlu0 2
    %568 = vperm.xlu0 %567, %v46
    %v569 = vpop.permute.xlu0 %568
    %571 = vset.pattern.permute.xlu0 2
    %572 = vperm.xlu0 %571, %v47
    %v573 = vpop.permute.xlu0 %572
    %575 = vset.pattern.permute.xlu0 2
    %576 = vperm.xlu0 %575, %v48
    %v577 = vpop.permute.xlu0 %576
    %579 = vset.pattern.permute.xlu0 2
    %580 = vperm.xlu0 %579, %v49
    %v581 = vpop.permute.xlu0 %580
    %583 = vset.pattern.permute.xlu0 2
    %584 = vperm.xlu0 %583, %v50
    %v585 = vpop.permute.xlu0 %584
    %587 = vset.pattern.permute.xlu0 2
    %588 = vperm.xlu0 %587, %v51
    %v589 = vpop.permute.xlu0 %588
    %591 = vset.pattern.permute.xlu0 2
    %592 = vperm.xlu0 %591, %v52
    %v593 = vpop.permute.xlu0 %592
    %595 = vset.pattern.permute.xlu0 2
    %596 = vperm.xlu0 %595, %v53
    %v597 = vpop.permute.xlu0 %596
    %599 = vset.pattern.permute.xlu0 2
    %600 = vperm.xlu0 %599, %v54
    %v601 = vpop.permute.xlu0 %600
    %603 = vset.pattern.permute.xlu0 2
    %604 = vperm.xlu0 %603, %v55
    %v605 = vpop.permute.xlu0 %604
    %607 = vset.pattern.permute.xlu0 2
    %608 = vperm.xlu0 %607, %v56
    %v609 = vpop.permute.xlu0 %608
    %v611 = vlaneseq
    %v612 = vshrl.u32 %v611, 7
    %v613 = vsub.s32 2, %v612
    %v614 = vrot.slane %v24, %v613
    %v615 = vmul.f32 %v485, %v614
    %v616 = vmul.f32 %v489, %v614
    %v617 = vmul.f32 %v493, %v614
    %v618 = vmul.f32 %v497, %v614
    %v619 = vmul.f32 %v501, %v614
    %v620 = vmul.f32 %v505, %v614
    %v621 = vmul.f32 %v509, %v614
    %v622 = vmul.f32 %v513, %v614
    %v623 = vmul.f32 %v517, %v614
    %v624 = vmul.f32 %v521, %v614
    %v625 = vmul.f32 %v525, %v614
    %v626 = vmul.f32 %v529, %v614
    %v627 = vmul.f32 %v533, %v614
    %v628 = vmul.f32 %v537, %v614
    %v629 = vmul.f32 %v541, %v614
    %v630 = vmul.f32 %v545, %v614
    %v631 = vmul.f32 %v549, %v614
    %v632 = vmul.f32 %v553, %v614
    %v633 = vmul.f32 %v557, %v614
    %v634 = vmul.f32 %v561, %v614
    %v635 = vmul.f32 %v565, %v614
    %v636 = vmul.f32 %v569, %v614
    %v637 = vmul.f32 %v573, %v614
    %v638 = vmul.f32 %v577, %v614
    %v639 = vmul.f32 %v581, %v614
    %v640 = vmul.f32 %v585, %v614
    %v641 = vmul.f32 %v589, %v614
    %v642 = vmul.f32 %v593, %v614
    %v643 = vmul.f32 %v597, %v614
    %v644 = vmul.f32 %v601, %v614
    %v645 = vmul.f32 %v605, %v614
    %v646 = vmul.f32 %v609, %v614
    %v647 = vadd.f32 %v451, %v615
    %v648 = vadd.f32 %v452, %v616
    %v649 = vadd.f32 %v453, %v617
    %v650 = vadd.f32 %v454, %v618
    %v651 = vadd.f32 %v455, %v619
    %v652 = vadd.f32 %v456, %v620
    %v653 = vadd.f32 %v457, %v621
    %v654 = vadd.f32 %v458, %v622
    %v655 = vadd.f32 %v459, %v623
    %v656 = vadd.f32 %v460, %v624
    %v657 = vadd.f32 %v461, %v625
    %v658 = vadd.f32 %v462, %v626
    %v659 = vadd.f32 %v463, %v627
    %v660 = vadd.f32 %v464, %v628
    %v661 = vadd.f32 %v465, %v629
    %v662 = vadd.f32 %v466, %v630
    %v663 = vadd.f32 %v467, %v631
    %v664 = vadd.f32 %v468, %v632
    %v665 = vadd.f32 %v469, %v633
    %v666 = vadd.f32 %v470, %v634
    %v667 = vadd.f32 %v471, %v635
    %v668 = vadd.f32 %v472, %v636
    %v669 = vadd.f32 %v473, %v637
    %v670 = vadd.f32 %v474, %v638
    %v671 = vadd.f32 %v475, %v639
    %v672 = vadd.f32 %v476, %v640
    %v673 = vadd.f32 %v477, %v641
    %v674 = vadd.f32 %v478, %v642
    %v675 = vadd.f32 %v479, %v643
    %v676 = vadd.f32 %v480, %v644
    %v677 = vadd.f32 %v481, %v645
    %v678 = vadd.f32 %v482, %v646
    %679 = vset.pattern.permute.xlu0 3
    %680 = vperm.xlu0 %679, %v25
    %v681 = vpop.permute.xlu0 %680
    %683 = vset.pattern.permute.xlu0 3
    %684 = vperm.xlu0 %683, %v26
    %v685 = vpop.permute.xlu0 %684
    %687 = vset.pattern.permute.xlu0 3
    %688 = vperm.xlu0 %687, %v27
    %v689 = vpop.permute.xlu0 %688
    %691 = vset.pattern.permute.xlu0 3
    %692 = vperm.xlu0 %691, %v28
    %v693 = vpop.permute.xlu0 %692
    %695 = vset.pattern.permute.xlu0 3
    %696 = vperm.xlu0 %695, %v29
    %v697 = vpop.permute.xlu0 %696
    %699 = vset.pattern.permute.xlu0 3
    %700 = vperm.xlu0 %699, %v30
    %v701 = vpop.permute.xlu0 %700
    %703 = vset.pattern.permute.xlu0 3
    %704 = vperm.xlu0 %703, %v31
    %v705 = vpop.permute.xlu0 %704
    %707 = vset.pattern.permute.xlu0 3
    %708 = vperm.xlu0 %707, %v32
    %v709 = vpop.permute.xlu0 %708
    %711 = vset.pattern.permute.xlu0 3
    %712 = vperm.xlu0 %711, %v33
    %v713 = vpop.permute.xlu0 %712
    %715 = vset.pattern.permute.xlu0 3
    %716 = vperm.xlu0 %715, %v34
    %v717 = vpop.permute.xlu0 %716
    %719 = vset.pattern.permute.xlu0 3
    %720 = vperm.xlu0 %719, %v35
    %v721 = vpop.permute.xlu0 %720
    %723 = vset.pattern.permute.xlu0 3
    %724 = vperm.xlu0 %723, %v36
    %v725 = vpop.permute.xlu0 %724
    %727 = vset.pattern.permute.xlu0 3
    %728 = vperm.xlu0 %727, %v37
    %v729 = vpop.permute.xlu0 %728
    %731 = vset.pattern.permute.xlu0 3
    %732 = vperm.xlu0 %731, %v38
    %v733 = vpop.permute.xlu0 %732
    %735 = vset.pattern.permute.xlu0 3
    %736 = vperm.xlu0 %735, %v39
    %v737 = vpop.permute.xlu0 %736
    %739 = vset.pattern.permute.xlu0 3
    %740 = vperm.xlu0 %739, %v40
    %v741 = vpop.permute.xlu0 %740
    %743 = vset.pattern.permute.xlu0 3
    %744 = vperm.xlu0 %743, %v41
    %v745 = vpop.permute.xlu0 %744
    %747 = vset.pattern.permute.xlu0 3
    %748 = vperm.xlu0 %747, %v42
    %v749 = vpop.permute.xlu0 %748
    %751 = vset.pattern.permute.xlu0 3
    %752 = vperm.xlu0 %751, %v43
    %v753 = vpop.permute.xlu0 %752
    %755 = vset.pattern.permute.xlu0 3
    %756 = vperm.xlu0 %755, %v44
    %v757 = vpop.permute.xlu0 %756
    %759 = vset.pattern.permute.xlu0 3
    %760 = vperm.xlu0 %759, %v45
    %v761 = vpop.permute.xlu0 %760
    %763 = vset.pattern.permute.xlu0 3
    %764 = vperm.xlu0 %763, %v46
    %v765 = vpop.permute.xlu0 %764
    %767 = vset.pattern.permute.xlu0 3
    %768 = vperm.xlu0 %767, %v47
    %v769 = vpop.permute.xlu0 %768
    %771 = vset.pattern.permute.xlu0 3
    %772 = vperm.xlu0 %771, %v48
    %v773 = vpop.permute.xlu0 %772
    %775 = vset.pattern.permute.xlu0 3
    %776 = vperm.xlu0 %775, %v49
    %v777 = vpop.permute.xlu0 %776
    %779 = vset.pattern.permute.xlu0 3
    %780 = vperm.xlu0 %779, %v50
    %v781 = vpop.permute.xlu0 %780
    %783 = vset.pattern.permute.xlu0 3
    %784 = vperm.xlu0 %783, %v51
    %v785 = vpop.permute.xlu0 %784
    %787 = vset.pattern.permute.xlu0 3
    %788 = vperm.xlu0 %787, %v52
    %v789 = vpop.permute.xlu0 %788
    %791 = vset.pattern.permute.xlu0 3
    %792 = vperm.xlu0 %791, %v53
    %v793 = vpop.permute.xlu0 %792
    %795 = vset.pattern.permute.xlu0 3
    %796 = vperm.xlu0 %795, %v54
    %v797 = vpop.permute.xlu0 %796
    %799 = vset.pattern.permute.xlu0 3
    %800 = vperm.xlu0 %799, %v55
    %v801 = vpop.permute.xlu0 %800
    %803 = vset.pattern.permute.xlu0 3
    %804 = vperm.xlu0 %803, %v56
    %v805 = vpop.permute.xlu0 %804
    %v807 = vlaneseq
    %v808 = vshrl.u32 %v807, 7
    %v809 = vsub.s32 3, %v808
    %v810 = vrot.slane %v24, %v809
    %v811 = vmul.f32 %v681, %v810
    %v812 = vmul.f32 %v685, %v810
    %v813 = vmul.f32 %v689, %v810
    %v814 = vmul.f32 %v693, %v810
    %v815 = vmul.f32 %v697, %v810
    %v816 = vmul.f32 %v701, %v810
    %v817 = vmul.f32 %v705, %v810
    %v818 = vmul.f32 %v709, %v810
    %v819 = vmul.f32 %v713, %v810
    %v820 = vmul.f32 %v717, %v810
    %v821 = vmul.f32 %v721, %v810
    %v822 = vmul.f32 %v725, %v810
    %v823 = vmul.f32 %v729, %v810
    %v824 = vmul.f32 %v733, %v810
    %v825 = vmul.f32 %v737, %v810
    %v826 = vmul.f32 %v741, %v810
    %v827 = vmul.f32 %v745, %v810
    %v828 = vmul.f32 %v749, %v810
    %v829 = vmul.f32 %v753, %v810
    %v830 = vmul.f32 %v757, %v810
    %v831 = vmul.f32 %v761, %v810
    %v832 = vmul.f32 %v765, %v810
    %v833 = vmul.f32 %v769, %v810
    %v834 = vmul.f32 %v773, %v810
    %v835 = vmul.f32 %v777, %v810
    %v836 = vmul.f32 %v781, %v810
    %v837 = vmul.f32 %v785, %v810
    %v838 = vmul.f32 %v789, %v810
    %v839 = vmul.f32 %v793, %v810
    %v840 = vmul.f32 %v797, %v810
    %v841 = vmul.f32 %v801, %v810
    %v842 = vmul.f32 %v805, %v810
    %v843 = vadd.f32 %v647, %v811
    %v844 = vadd.f32 %v648, %v812
    %v845 = vadd.f32 %v649, %v813
    %v846 = vadd.f32 %v650, %v814
    %v847 = vadd.f32 %v651, %v815
    %v848 = vadd.f32 %v652, %v816
    %v849 = vadd.f32 %v653, %v817
    %v850 = vadd.f32 %v654, %v818
    %v851 = vadd.f32 %v655, %v819
    %v852 = vadd.f32 %v656, %v820
    %v853 = vadd.f32 %v657, %v821
    %v854 = vadd.f32 %v658, %v822
    %v855 = vadd.f32 %v659, %v823
    %v856 = vadd.f32 %v660, %v824
    %v857 = vadd.f32 %v661, %v825
    %v858 = vadd.f32 %v662, %v826
    %v859 = vadd.f32 %v663, %v827
    %v860 = vadd.f32 %v664, %v828
    %v861 = vadd.f32 %v665, %v829
    %v862 = vadd.f32 %v666, %v830
    %v863 = vadd.f32 %v667, %v831
    %v864 = vadd.f32 %v668, %v832
    %v865 = vadd.f32 %v669, %v833
    %v866 = vadd.f32 %v670, %v834
    %v867 = vadd.f32 %v671, %v835
    %v868 = vadd.f32 %v672, %v836
    %v869 = vadd.f32 %v673, %v837
    %v870 = vadd.f32 %v674, %v838
    %v871 = vadd.f32 %v675, %v839
    %v872 = vadd.f32 %v676, %v840
    %v873 = vadd.f32 %v677, %v841
    %v874 = vadd.f32 %v678, %v842
    %876 = vset.pattern.permute.xlu0 0
    %877 = vperm.xlu0 %876, %v57
    %v878 = vpop.permute.xlu0 %877
    %881 = vset.pattern.permute.xlu0 0
    %882 = vperm.xlu0 %881, %v58
    %v883 = vpop.permute.xlu0 %882
    %886 = vset.pattern.permute.xlu0 0
    %887 = vperm.xlu0 %886, %v59
    %v888 = vpop.permute.xlu0 %887
    %891 = vset.pattern.permute.xlu0 0
    %892 = vperm.xlu0 %891, %v60
    %v893 = vpop.permute.xlu0 %892
    %896 = vset.pattern.permute.xlu0 0
    %897 = vperm.xlu0 %896, %v61
    %v898 = vpop.permute.xlu0 %897
    %901 = vset.pattern.permute.xlu0 0
    %902 = vperm.xlu0 %901, %v62
    %v903 = vpop.permute.xlu0 %902
    %906 = vset.pattern.permute.xlu0 0
    %907 = vperm.xlu0 %906, %v63
    %v908 = vpop.permute.xlu0 %907
    %911 = vset.pattern.permute.xlu0 0
    %912 = vperm.xlu0 %911, %v64
    %v913 = vpop.permute.xlu0 %912
    %916 = vset.pattern.permute.xlu0 0
    %917 = vperm.xlu0 %916, %v65
    %v918 = vpop.permute.xlu0 %917
    %921 = vset.pattern.permute.xlu0 0
    %922 = vperm.xlu0 %921, %v66
    %v923 = vpop.permute.xlu0 %922
    %926 = vset.pattern.permute.xlu0 0
    %927 = vperm.xlu0 %926, %v67
    %v928 = vpop.permute.xlu0 %927
    %931 = vset.pattern.permute.xlu0 0
    %932 = vperm.xlu0 %931, %v68
    %v933 = vpop.permute.xlu0 %932
    %936 = vset.pattern.permute.xlu0 0
    %937 = vperm.xlu0 %936, %v69
    %v938 = vpop.permute.xlu0 %937
    %941 = vset.pattern.permute.xlu0 0
    %942 = vperm.xlu0 %941, %v70
    %v943 = vpop.permute.xlu0 %942
    %946 = vset.pattern.permute.xlu0 0
    %947 = vperm.xlu0 %946, %v71
    %v948 = vpop.permute.xlu0 %947
    %951 = vset.pattern.permute.xlu0 0
    %952 = vperm.xlu0 %951, %v72
    %v953 = vpop.permute.xlu0 %952
    %956 = vset.pattern.permute.xlu0 0
    %957 = vperm.xlu0 %956, %v73
    %v958 = vpop.permute.xlu0 %957
    %961 = vset.pattern.permute.xlu0 0
    %962 = vperm.xlu0 %961, %v74
    %v963 = vpop.permute.xlu0 %962
    %966 = vset.pattern.permute.xlu0 0
    %967 = vperm.xlu0 %966, %v75
    %v968 = vpop.permute.xlu0 %967
    %971 = vset.pattern.permute.xlu0 0
    %972 = vperm.xlu0 %971, %v76
    %v973 = vpop.permute.xlu0 %972
    %976 = vset.pattern.permute.xlu0 0
    %977 = vperm.xlu0 %976, %v77
    %v978 = vpop.permute.xlu0 %977
    %981 = vset.pattern.permute.xlu0 0
    %982 = vperm.xlu0 %981, %v78
    %v983 = vpop.permute.xlu0 %982
    %986 = vset.pattern.permute.xlu0 0
    %987 = vperm.xlu0 %986, %v79
    %v988 = vpop.permute.xlu0 %987
    %991 = vset.pattern.permute.xlu0 0
    %992 = vperm.xlu0 %991, %v80
    %v993 = vpop.permute.xlu0 %992
    %996 = vset.pattern.permute.xlu0 0
    %997 = vperm.xlu0 %996, %v81
    %v998 = vpop.permute.xlu0 %997
    %1001 = vset.pattern.permute.xlu0 0
    %1002 = vperm.xlu0 %1001, %v82
    %v1003 = vpop.permute.xlu0 %1002
    %1006 = vset.pattern.permute.xlu0 0
    %1007 = vperm.xlu0 %1006, %v83
    %v1008 = vpop.permute.xlu0 %1007
    %1011 = vset.pattern.permute.xlu0 0
    %1012 = vperm.xlu0 %1011, %v84
    %v1013 = vpop.permute.xlu0 %1012
    %1016 = vset.pattern.permute.xlu0 0
    %1017 = vperm.xlu0 %1016, %v85
    %v1018 = vpop.permute.xlu0 %1017
    %1021 = vset.pattern.permute.xlu0 0
    %1022 = vperm.xlu0 %1021, %v86
    %v1023 = vpop.permute.xlu0 %1022
    %1026 = vset.pattern.permute.xlu0 0
    %1027 = vperm.xlu0 %1026, %v87
    %v1028 = vpop.permute.xlu0 %1027
    %1031 = vset.pattern.permute.xlu0 0
    %1032 = vperm.xlu0 %1031, %v88
    %v1033 = vpop.permute.xlu0 %1032
    %v1035 = vadd.f32 %v843, %v878
    %v1036 = vadd.f32 %v844, %v883
    %v1037 = vadd.f32 %v845, %v888
    %v1038 = vadd.f32 %v846, %v893
    %v1039 = vadd.f32 %v847, %v898
    %v1040 = vadd.f32 %v848, %v903
    %v1041 = vadd.f32 %v849, %v908
    %v1042 = vadd.f32 %v850, %v913
    %v1043 = vadd.f32 %v851, %v918
    %v1044 = vadd.f32 %v852, %v923
    %v1045 = vadd.f32 %v853, %v928
    %v1046 = vadd.f32 %v854, %v933
    %v1047 = vadd.f32 %v855, %v938
    %v1048 = vadd.f32 %v856, %v943
    %v1049 = vadd.f32 %v857, %v948
    %v1050 = vadd.f32 %v858, %v953
    %v1051 = vadd.f32 %v859, %v958
    %v1052 = vadd.f32 %v860, %v963
    %v1053 = vadd.f32 %v861, %v968
    %v1054 = vadd.f32 %v862, %v973
    %v1055 = vadd.f32 %v863, %v978
    %v1056 = vadd.f32 %v864, %v983
    %v1057 = vadd.f32 %v865, %v988
    %v1058 = vadd.f32 %v866, %v993
    %v1059 = vadd.f32 %v867, %v998
    %v1060 = vadd.f32 %v868, %v1003
    %v1061 = vadd.f32 %v869, %v1008
    %v1062 = vadd.f32 %v870, %v1013
    %v1063 = vadd.f32 %v871, %v1018
    %v1064 = vadd.f32 %v872, %v1023
    %v1065 = vadd.f32 %v873, %v1028
    %v1066 = vadd.f32 %v874, %v1033
    %v1067 = vmax.f32 %v1035, 0.0
    %v1068 = vmax.f32 %v1036, 0.0
    %v1069 = vmax.f32 %v1037, 0.0
    %v1070 = vmax.f32 %v1038, 0.0
    %v1071 = vmax.f32 %v1039, 0.0
    %v1072 = vmax.f32 %v1040, 0.0
    %v1073 = vmax.f32 %v1041, 0.0
    %v1074 = vmax.f32 %v1042, 0.0
    %v1075 = vmax.f32 %v1043, 0.0
    %v1076 = vmax.f32 %v1044, 0.0
    %v1077 = vmax.f32 %v1045, 0.0
    %v1078 = vmax.f32 %v1046, 0.0
    %v1079 = vmax.f32 %v1047, 0.0
    %v1080 = vmax.f32 %v1048, 0.0
    %v1081 = vmax.f32 %v1049, 0.0
    %v1082 = vmax.f32 %v1050, 0.0
    %v1083 = vmax.f32 %v1051, 0.0
    %v1084 = vmax.f32 %v1052, 0.0
    %v1085 = vmax.f32 %v1053, 0.0
    %v1086 = vmax.f32 %v1054, 0.0
    %v1087 = vmax.f32 %v1055, 0.0
    %v1088 = vmax.f32 %v1056, 0.0
    %v1089 = vmax.f32 %v1057, 0.0
    %v1090 = vmax.f32 %v1058, 0.0
    %v1091 = vmax.f32 %v1059, 0.0
    %v1092 = vmax.f32 %v1060, 0.0
    %v1093 = vmax.f32 %v1061, 0.0
    %v1094 = vmax.f32 %v1062, 0.0
    %v1095 = vmax.f32 %v1063, 0.0
    %v1096 = vmax.f32 %v1064, 0.0
    %v1097 = vmax.f32 %v1065, 0.0
    %v1098 = vmax.f32 %v1066, 0.0
    %1100 = vset.pattern.permute.xlu0 0
    %1101 = vperm.xlu0 %1100, %v90
    %v1102 = vpop.permute.xlu0 %1101
    %v1106 = vunpack.c.l.s4 1983009808
    %v1107 = vunpack.c.0.s8 %v1106
    %v1108 = vlaneseq
    %v1109 = vshrl.u32 %v1108, 7
    %v1110 = vsub.s32 %v1107, %v1109
    %v1111 = vrot.slane %v89, %v1110
    %v1112 = vcombine.high %v1111, %v1111
    %1115 = vmatprep.subr.mxu0 0.0
    %1116 = vmatpush1.msra.mxu0 %v1067
    %1117 = vmatprep.subr.mxu0 0.0
    %1118 = vmatpush1.msra.mxu0 %v1068
    %1119 = vmatprep.subr.mxu0 0.0
    %1120 = vmatpush1.msra.mxu0 %v1069
    %1121 = vmatprep.subr.mxu0 0.0
    %1122 = vmatpush1.msra.mxu0 %v1070
    %1123 = vmatprep.subr.mxu0 0.0
    %1124 = vmatpush1.msra.mxu0 %v1071
    %1125 = vmatprep.subr.mxu0 0.0
    %1126 = vmatpush1.msra.mxu0 %v1072
    %1127 = vmatprep.subr.mxu0 0.0
    %1128 = vmatpush1.msra.mxu0 %v1073
    %1129 = vmatprep.subr.mxu0 0.0
    %1130 = vmatpush1.msra.mxu0 %v1074
    %1131 = vmatprep.subr.mxu0 0.0
    %1132 = vmatpush1.msra.mxu0 %v1075
    %1133 = vmatprep.subr.mxu0 0.0
    %1134 = vmatpush1.msra.mxu0 %v1076
    %1135 = vmatprep.subr.mxu0 0.0
    %1136 = vmatpush1.msra.mxu0 %v1077
    %1137 = vmatprep.subr.mxu0 0.0
    %1138 = vmatpush1.msra.mxu0 %v1078
    %1139 = vmatprep.subr.mxu0 0.0
    %1140 = vmatpush1.msra.mxu0 %v1079
    %1141 = vmatprep.subr.mxu0 0.0
    %1142 = vmatpush1.msra.mxu0 %v1080
    %1143 = vmatprep.subr.mxu0 0.0
    %1144 = vmatpush1.msra.mxu0 %v1081
    %1145 = vmatprep.subr.mxu0 0.0
    %1146 = vmatpush1.msra.mxu0 %v1082
    %1147 = vmatprep.subr.mxu0 0.0
    %1148 = vmatpush1.msra.mxu0 %v1083
    %1149 = vmatprep.subr.mxu0 0.0
    %1150 = vmatpush1.msra.mxu0 %v1084
    %1151 = vmatprep.subr.mxu0 0.0
    %1152 = vmatpush1.msra.mxu0 %v1085
    %1153 = vmatprep.subr.mxu0 0.0
    %1154 = vmatpush1.msra.mxu0 %v1086
    %1155 = vmatprep.subr.mxu0 0.0
    %1156 = vmatpush1.msra.mxu0 %v1087
    %1157 = vmatprep.subr.mxu0 0.0
    %1158 = vmatpush1.msra.mxu0 %v1088
    %1159 = vmatprep.subr.mxu0 0.0
    %1160 = vmatpush1.msra.mxu0 %v1089
    %1161 = vmatprep.subr.mxu0 0.0
    %1162 = vmatpush1.msra.mxu0 %v1090
    %1163 = vmatprep.subr.mxu0 0.0
    %1164 = vmatpush1.msra.mxu0 %v1091
    %1165 = vmatprep.subr.mxu0 0.0
    %1166 = vmatpush1.msra.mxu0 %v1092
    %1167 = vmatprep.subr.mxu0 0.0
    %1168 = vmatpush1.msra.mxu0 %v1093
    %1169 = vmatprep.subr.mxu0 0.0
    %1170 = vmatpush1.msra.mxu0 %v1094
    %1171 = vmatprep.subr.mxu0 0.0
    %1172 = vmatpush1.msra.mxu0 %v1095
    %1173 = vmatprep.subr.mxu0 0.0
    %1174 = vmatpush1.msra.mxu0 %v1096
    %1175 = vmatprep.subr.mxu0 0.0
    %1176 = vmatpush1.msra.mxu0 %v1097
    %1177 = vmatprep.subr.mxu0 0.0
    %1178 = vmatpush1.msra.mxu0 %v1098
    %1179 = vmatprep.mubr.f32.mxu0 %v1112
    %1180 = vmatmul.mubr.f32.gmra.mrb[0].mxu0 %v1111
    %v1181 = vpop.f32.mrb[0].mxu0
    %v1182 = vadd.f32 %v1102, %v1181
    %v1183 = vpop.f32.mrb[0].mxu0
    %1184 = vdwg.mxu0
    %vm1185 = vcmask 58368
    %1186 = vst.msk [vmem:[#allocation2] sm:$0x3] %vm1185, %v1182
    %v1188 = vrot.slane %v1182, 7
    %vm1190 = vcmp.gt.f32.partialorder %v1182, %v1188
    %v1191 = vsel %vm1190, 1, 0
    %vm1192 = vcmask 58369
    %1193 = vst.msk [vmem:[#allocation4 - $0x1] sm:$0x2] %vm1192, %v1191
    // Predicated region
    $region22: #{tpu_custom_call.1} parent=1 // pred_check
      _
    $region23: #{tpu_custom_call.1} parent=1 // pred_check_branch
      %1195 = sbr.rel (0) target = $region25
    $region24: #{tpu_custom_call.1} parent=1 // pred_region
      %s1197 = ssub.s32 32, 32
      %1198 = vsyncadd [#allocation3], %s1197
      %s1200 = sshll.u32 [#allocation2], 4
      %s1201 = int_to_ptr.vmem [resolvable:$true] %s1200
      %1203 = dma.vmem_to_hbm [thread:$0]  %s1201, 32, %s5, [#allocation3]
    $region25: #{tpu_custom_call.1} parent=1 // pred_fallthru
      _
    // Predicated region
    $region26: #{tpu_custom_call.1} parent=1 // pred_check
      _
    $region27: #{tpu_custom_call.1} parent=1 // pred_check_branch
      %1205 = sbr.rel (0) target = $region29
    $region28: #{tpu_custom_call.1} parent=1 // pred_region
      %s1207 = ssub.s32 16, 16
      %1208 = vsyncadd [#allocation5], %s1207
      %s1210 = sshll.u32 [#allocation4], 4
      %s1211 = int_to_ptr.vmem [resolvable:$true] %s1210
      %1213 = dma.vmem_to_hbm [thread:$0]  %s1211, 16, %s6, [#allocation5]
    $region29: #{tpu_custom_call.1} parent=1 // pred_fallthru
      _
    // Predicated region
    $region30: #{tpu_custom_call.1} parent=1 // pred_check
      _
    $region31: #{tpu_custom_call.1} parent=1 // pred_check_branch
      %1215 = sbr.rel (0) target = $region33
    $region32: #{tpu_custom_call.1} parent=1 // pred_region
      %1216 = dma.done [#allocation3], 32
    $region33: #{tpu_custom_call.1} parent=1 // pred_fallthru
      _
    // Predicated region
    $region34: #{tpu_custom_call.1} parent=1 // pred_check
      _
    $region35: #{tpu_custom_call.1} parent=1 // pred_check_branch
      %1218 = sbr.rel (0) target = $region37
    $region36: #{tpu_custom_call.1} parent=1 // pred_region
      %1219 = dma.done [#allocation5], 16
    $region37: #{tpu_custom_call.1} parent=1 // pred_fallthru
      _
    %1220 = vsyncpa [#allocation3], 1
    %1221 = vsyncpa [#allocation5], 1

</llo_original>
